<compile_context>
chip_gen: v6e
topology: v6e:2x2x1
jax: 0.10.0
libtpu: 0.0.40
codegen_flags: <defaults>
</compile_context>

<pallas_src>
import functools

import jax
import jax.numpy as jnp
from jax.experimental import pallas as pl
from jax.experimental.pallas import tpu as pltpu


def _attention_kernel(x_ref, wqkv_ref, wout_ref, bout_ref, o_ref, hout_ref,
                      *, heads, q_chunk):
    # x_ref:    (N, D)  f32   one batch element per grid step
    # wqkv_ref: (D, 3D) bf16  (scale folded into the Q columns)
    # wout_ref: (D, D)  bf16
    # bout_ref: (1, D)  f32
    # o_ref:    (N, D)  f32
    # hout_ref: (N, D)  bf16  VMEM scratch holding the concatenated head outputs
    n, d = x_ref.shape
    dh = d // heads

    # Single QKV projection: (N, D) @ (D, 3D) -> (N, 3D), bf16 MXU, f32 acc.
    x_bf = x_ref[...].astype(jnp.bfloat16)
    qkv = jnp.dot(x_bf, wqkv_ref[...], preferred_element_type=jnp.float32)

    # Q is already scaled (scale folded into W_q at weight-prep).
    q = qkv[:, 0 * d:1 * d].astype(jnp.bfloat16)
    k = qkv[:, 1 * d:2 * d].astype(jnp.bfloat16)
    v = qkv[:, 2 * d:3 * d].astype(jnp.bfloat16)

    # Per-head attention. `heads` and the query-chunk loop bounds are small
    # static constants, so this unrolls; only a (tq, N) f32 score tile is live
    # at a time, and head outputs go straight to the VMEM scratch (no register-
    # carried (N, D) accumulator).
    for h in range(heads):
        kh = k[:, h * dh:(h + 1) * dh]                 # (N, dh) bf16
        vh = v[:, h * dh:(h + 1) * dh]                 # (N, dh) bf16
        for q0 in range(0, n, q_chunk):
            tq = min(q_chunk, n - q0)
            qh = q[q0:q0 + tq, h * dh:(h + 1) * dh]    # (tq, dh) bf16

            # scores = q_h @ k_h^T as a last-dim contraction (no explicit
            # transpose), f32 accumulation on the MXU.
            s = jax.lax.dot_general(
                qh, kh,
                dimension_numbers=(((1,), (1,)), ((), ())),
                preferred_element_type=jnp.float32)    # (tq, N) f32

            # Numerically-stable softmax, normalization DEFERRED:
            #   e <= 1 after max subtraction  -> safe to cast to bf16,
            #   row sum / reciprocal stay f32 (sums can reach N).
            m = jnp.max(s, axis=-1, keepdims=True)
            e = jnp.exp(s - m)                                         # (tq, N) f32
            o_un = jnp.dot(e.astype(jnp.bfloat16), vh,
                           preferred_element_type=jnp.float32)         # (tq, dh) f32
            inv = pl.reciprocal(jnp.sum(e, axis=-1, keepdims=True),
                                approx=True)                           # (tq, 1) f32

            hout_ref[q0:q0 + tq, h * dh:(h + 1) * dh] = \
                (o_un * inv).astype(jnp.bfloat16)

    # One fat output projection over the full D contraction (much better MXU
    # fill than `heads` small dh-contractions), bias add, Dropout(0)=identity.
    out = jnp.dot(hout_ref[...], wout_ref[...],
                  preferred_element_type=jnp.float32)                  # (N, D) f32
    o_ref[...] = (out + bout_ref[...]).astype(o_ref.dtype)


def prepare_attention_weights(w_qkv, w_out, b_out, *, dim):
    """One-time weight prep: fold dim**-0.5 into W_q and cast weights to bf16."""
    scale = float(dim) ** -0.5
    w_qkv = jnp.asarray(w_qkv, jnp.float32)
    w_qkv = w_qkv.at[:, :dim].multiply(scale)          # fold scale into Q cols
    return (w_qkv.astype(jnp.bfloat16),
            jnp.asarray(w_out, jnp.float32).astype(jnp.bfloat16),
            jnp.asarray(b_out, jnp.float32).reshape(1, dim))


def attention_forward(x, w_qkv_bf, w_out_bf, b_out, *, heads, q_chunk=256):
    """x: (B, N, D) f32; prepared weights from prepare_attention_weights."""
    b, n, d = x.shape
    assert d % heads == 0, "dim must be divisible by heads"
    # Block-shape rule: last two dims must be (8,128)-divisible or full extents.
    assert (n % 8 == 0) or (b == 1), "seq length must be a multiple of 8 (or B==1)"
    q_chunk = min(q_chunk, n)

    kernel = functools.partial(_attention_kernel, heads=heads, q_chunk=q_chunk)

    # Flatten (B, N, D) -> (B*N, D): 2-D lane-major tiles; each grid step owns
    # one batch element; "parallel" grid keeps both v7x TensorCores busy.
    x2 = x.reshape(b * n, d)

    # Cost estimate (qkv proj + scores + attn@v + out proj; exp per score).
    flops = b * (8 * n * d * d + 4 * n * n * d)
    transcendentals = b * heads * n * n
    bytes_accessed = (4 * 2 * b * n * d          # x in + out, f32
                      + 2 * (3 * d * d + d * d)  # bf16 weights
                      + 4 * d)                   # bias

    # Explicit scoped-VMEM limit sized from the block footprint (weights are
    # single-buffered; x/out blocks double-buffered; in-kernel temporaries).
    footprint = (2 * 3 * d * d + 2 * d * d + 4 * d          # bf16 weights + bias
                 + 2 * 2 * n * d * 4                        # x + out blocks, 2 bufs
                 + n * d * 2                                # head-output scratch
                 + n * 3 * d * 4 + n * 3 * d * 2            # qkv f32 + q/k/v bf16
                 + 2 * q_chunk * n * 4 + q_chunk * d * 4)   # score tiles + partial out
    vmem_limit = int(min(64 * 2**20, max(32 * 2**20, int(footprint * 1.5))))

    weight_mode = pl.Buffered(buffer_count=1)   # constant index_map -> never refetched

    out2 = pl.pallas_call(
        kernel,
        out_shape=jax.ShapeDtypeStruct((b * n, d), x.dtype),
        grid_spec=pltpu.PrefetchScalarGridSpec(
            num_scalar_prefetch=0,
            grid=(b,),
            in_specs=[
                pl.BlockSpec((n, d), lambda i: (i, 0)),                 # x rows of batch i
                pl.BlockSpec((d, 3 * d), lambda i: (0, 0),
                             pipeline_mode=weight_mode),                # w_qkv (whole)
                pl.BlockSpec((d, d), lambda i: (0, 0),
                             pipeline_mode=weight_mode),                # w_out (whole)
                pl.BlockSpec((1, d), lambda i: (0, 0),
                             pipeline_mode=weight_mode),                # b_out (whole)
            ],
            out_specs=pl.BlockSpec((n, d), lambda i: (i, 0)),
            scratch_shapes=[pltpu.VMEM((n, d), jnp.bfloat16)],          # head outputs
        ),
        compiler_params=pltpu.CompilerParams(
            dimension_semantics=("parallel",),
            vmem_limit_bytes=vmem_limit,
        ),
        cost_estimate=pl.CostEstimate(
            flops=flops,
            transcendentals=transcendentals,
            bytes_accessed=bytes_accessed,
        ),
    )(x2, w_qkv_bf, w_out_bf, b_out)

    return out2.reshape(b, n, d)


def attention_reference(x, w_qkv, w_out, b_out, *, heads):
    """Plain-JAX f32 reference mirroring the PyTorch forward (mask=None)."""
    b, n, d = x.shape
    dh = d // heads
    scale = float(d) ** -0.5
    qkv = x @ w_qkv                                            # (B, N, 3D)
    q, k, v = jnp.split(qkv, 3, axis=-1)

    def split_heads(t):                                        # 'b n (h d) -> b h n d'
        return t.reshape(b, n, heads, dh).transpose(0, 2, 1, 3)

    q, k, v = map(split_heads, (q, k, v))
    dots = jnp.einsum('bhid,bhjd->bhij', q, k) * scale
    attn = jax.nn.softmax(dots, axis=-1)
    out = jnp.einsum('bhij,bhjd->bhid', attn, v)
    out = out.transpose(0, 2, 1, 3).reshape(b, n, d)           # 'b h n d -> b n (h d)'
    return out @ w_out + b_out


if __name__ == "__main__":
    # Small shapes consistent with the module: batch=2, seq=8, dim=32, heads=4.
    B, N, D, HEADS = 2, 8, 32, 4

    key = jax.random.PRNGKey(0)
    k_x, k_qkv, k_out, k_b = jax.random.split(key, 4)

    x = jax.random.normal(k_x, (B, N, D), dtype=jnp.float32)

    # Synthetic parameters matching nn.Linear(dim, 3*dim, bias=False) and
    # nn.Linear(dim, dim), stored pre-transposed for `x @ W`.
    w_qkv = jax.random.normal(k_qkv, (D, 3 * D), dtype=jnp.float32) * (1.0 / jnp.sqrt(D))
    w_out = jax.random.normal(k_out, (D, D), dtype=jnp.float32) * (1.0 / jnp.sqrt(D))
    b_out = jax.random.normal(k_b, (1, D), dtype=jnp.float32) * 0.01

    # One-time weight prep (bf16 cast + scale fold), then the Pallas forward.
    w_qkv_bf, w_out_bf, b_out_p = prepare_attention_weights(w_qkv, w_out, b_out, dim=D)
    out = attention_forward(x, w_qkv_bf, w_out_bf, b_out_p, heads=HEADS)
    out = jax.block_until_ready(out)

    ref = attention_reference(x, w_qkv, w_out, b_out, heads=HEADS)
    assert out.shape == (B, N, D)
    # Tolerance reflects bf16 MXU operands (f32 accumulation) + approx reciprocal.
    assert jnp.allclose(out, ref, atol=3e-2, rtol=3e-2), "Pallas kernel mismatch vs reference"

    print("KERNEL_OK")
</pallas_src>

<mosaic_0001>
module attributes {stable_mosaic.version = 11 : i64} {
  func.func @_attention_kernel(%arg0: i32, %arg1: memref<8x32xf32, #tpu.memory_space<vmem>>, %arg2: memref<32x96xbf16, #tpu.memory_space<vmem>>, %arg3: memref<32x32xbf16, #tpu.memory_space<vmem>>, %arg4: memref<1x32xf32, #tpu.memory_space<vmem>>, %arg5: memref<8x32xf32, #tpu.memory_space<vmem>>, %arg6: memref<8x32xbf16, #tpu.memory_space<vmem>>) attributes {dimension_semantics = [#tpu.dimension_semantics<parallel>], iteration_bounds = array<i64: 2>, scalar_prefetch = 0 : i64, scratch_operands = 1 : i64, tpu.core_type = #tpu.core_type<tc>, window_params = [{transform_indices = @transform_0, window_bounds = array<i64: 8, 32>}, {pipeline_mode = #tpu.pipeline_mode<synchronous>, transform_indices = @transform_1, window_bounds = array<i64: 32, 96>}, {pipeline_mode = #tpu.pipeline_mode<synchronous>, transform_indices = @transform_2, window_bounds = array<i64: 32, 32>}, {pipeline_mode = #tpu.pipeline_mode<synchronous>, transform_indices = @transform_3, window_bounds = array<i64: 1, 32>}, {transform_indices = @transform_4, window_bounds = array<i64: 8, 32>}]} {
    %c0 = arith.constant 0 : index
    %c0_0 = arith.constant 0 : index
    %0 = vector.load %arg1[%c0, %c0_0] : memref<8x32xf32, #tpu.memory_space<vmem>>, vector<8x32xf32>
    %1 = arith.truncf %0 : vector<8x32xf32> to vector<8x32xbf16>
    %c0_1 = arith.constant 0 : index
    %c0_2 = arith.constant 0 : index
    %2 = vector.load %arg2[%c0_1, %c0_2] : memref<32x96xbf16, #tpu.memory_space<vmem>>, vector<32x96xbf16>
    %cst = arith.constant dense<0.000000e+00> : vector<8x96xf32>
    %3 = tpu.matmul %1, %2, %cst {dimension_numbers = #tpu.dot_dimension_numbers<[1], [0], [0], [1], [0, 0, 1, 1], [], []>} : vector<8x32xbf16>, vector<32x96xbf16>, vector<8x96xf32> -> vector<8x96xf32>
    %4 = vector.extract_strided_slice %3 {offsets = [0, 0], sizes = [8, 32], strides = [1, 1]} : vector<8x96xf32> to vector<8x32xf32>
    %5 = arith.truncf %4 : vector<8x32xf32> to vector<8x32xbf16>
    %6 = vector.extract_strided_slice %3 {offsets = [0, 32], sizes = [8, 32], strides = [1, 1]} : vector<8x96xf32> to vector<8x32xf32>
    %7 = arith.truncf %6 : vector<8x32xf32> to vector<8x32xbf16>
    %8 = vector.extract_strided_slice %3 {offsets = [0, 64], sizes = [8, 32], strides = [1, 1]} : vector<8x96xf32> to vector<8x32xf32>
    %9 = arith.truncf %8 : vector<8x32xf32> to vector<8x32xbf16>
    %10 = vector.extract_strided_slice %7 {offsets = [0, 0], sizes = [8, 8], strides = [1, 1]} : vector<8x32xbf16> to vector<8x8xbf16>
    %11 = vector.extract_strided_slice %9 {offsets = [0, 0], sizes = [8, 8], strides = [1, 1]} : vector<8x32xbf16> to vector<8x8xbf16>
    %12 = vector.extract_strided_slice %5 {offsets = [0, 0], sizes = [8, 8], strides = [1, 1]} : vector<8x32xbf16> to vector<8x8xbf16>
    %cst_3 = arith.constant dense<0.000000e+00> : vector<8x8xf32>
    %13 = tpu.matmul %12, %10, %cst_3 {dimension_numbers = #tpu.dot_dimension_numbers<[1], [1], [0], [0], [0, 0, 1, 0], [], []>} : vector<8x8xbf16>, vector<8x8xbf16>, vector<8x8xf32> -> vector<8x8xf32>
    %cst_4 = arith.constant dense<0xFF800000> : vector<8xf32>
    %14 = vector.multi_reduction <maximumf>, %13, %cst_4 [1] : vector<8x8xf32> to vector<8xf32>
    %15 = vector.shape_cast %14 : vector<8xf32> to vector<8x1xf32>
    %16 = vector.broadcast %15 : vector<8x1xf32> to vector<8x8xf32>
    %17 = arith.subf %13, %16 : vector<8x8xf32>
    %18 = math.exp %17 : vector<8x8xf32>
    %19 = arith.truncf %18 : vector<8x8xf32> to vector<8x8xbf16>
    %cst_5 = arith.constant dense<0.000000e+00> : vector<8x8xf32>
    %20 = tpu.matmul %19, %11, %cst_5 {dimension_numbers = #tpu.dot_dimension_numbers<[1], [0], [0], [1], [0, 0, 1, 1], [], []>} : vector<8x8xbf16>, vector<8x8xbf16>, vector<8x8xf32> -> vector<8x8xf32>
    %cst_6 = arith.constant dense<0.000000e+00> : vector<8xf32>
    %21 = vector.multi_reduction <add>, %18, %cst_6 [1] : vector<8x8xf32> to vector<8xf32>
    %22 = vector.shape_cast %21 : vector<8xf32> to vector<8x1xf32>
    %23 = tpu.reciprocal %22 {approx = true} : vector<8x1xf32> -> vector<8x1xf32>
    %24 = vector.broadcast %23 : vector<8x1xf32> to vector<8x8xf32>
    %25 = arith.mulf %20, %24 : vector<8x8xf32>
    %26 = arith.truncf %25 : vector<8x8xf32> to vector<8x8xbf16>
    %c0_7 = arith.constant 0 : index
    %c0_8 = arith.constant 0 : index
    %27 = vector.load %arg6[%c0_7, %c0_8] : memref<8x32xbf16, #tpu.memory_space<vmem>>, vector<8x8xbf16>
    tpu.vector_store %arg6[%c0_7, %c0_8], %26 {strides = array<i32>} : memref<8x32xbf16, #tpu.memory_space<vmem>>, vector<8x8xbf16>,
    %28 = vector.extract_strided_slice %7 {offsets = [0, 8], sizes = [8, 8], strides = [1, 1]} : vector<8x32xbf16> to vector<8x8xbf16>
    %29 = vector.extract_strided_slice %9 {offsets = [0, 8], sizes = [8, 8], strides = [1, 1]} : vector<8x32xbf16> to vector<8x8xbf16>
    %30 = vector.extract_strided_slice %5 {offsets = [0, 8], sizes = [8, 8], strides = [1, 1]} : vector<8x32xbf16> to vector<8x8xbf16>
    %cst_9 = arith.constant dense<0.000000e+00> : vector<8x8xf32>
    %31 = tpu.matmul %30, %28, %cst_9 {dimension_numbers = #tpu.dot_dimension_numbers<[1], [1], [0], [0], [0, 0, 1, 0], [], []>} : vector<8x8xbf16>, vector<8x8xbf16>, vector<8x8xf32> -> vector<8x8xf32>
    %cst_10 = arith.constant dense<0xFF800000> : vector<8xf32>
    %32 = vector.multi_reduction <maximumf>, %31, %cst_10 [1] : vector<8x8xf32> to vector<8xf32>
    %33 = vector.shape_cast %32 : vector<8xf32> to vector<8x1xf32>
    %34 = vector.broadcast %33 : vector<8x1xf32> to vector<8x8xf32>
    %35 = arith.subf %31, %34 : vector<8x8xf32>
    %36 = math.exp %35 : vector<8x8xf32>
    %37 = arith.truncf %36 : vector<8x8xf32> to vector<8x8xbf16>
    %cst_11 = arith.constant dense<0.000000e+00> : vector<8x8xf32>
    %38 = tpu.matmul %37, %29, %cst_11 {dimension_numbers = #tpu.dot_dimension_numbers<[1], [0], [0], [1], [0, 0, 1, 1], [], []>} : vector<8x8xbf16>, vector<8x8xbf16>, vector<8x8xf32> -> vector<8x8xf32>
    %cst_12 = arith.constant dense<0.000000e+00> : vector<8xf32>
    %39 = vector.multi_reduction <add>, %36, %cst_12 [1] : vector<8x8xf32> to vector<8xf32>
    %40 = vector.shape_cast %39 : vector<8xf32> to vector<8x1xf32>
    %41 = tpu.reciprocal %40 {approx = true} : vector<8x1xf32> -> vector<8x1xf32>
    %42 = vector.broadcast %41 : vector<8x1xf32> to vector<8x8xf32>
    %43 = arith.mulf %38, %42 : vector<8x8xf32>
    %44 = arith.truncf %43 : vector<8x8xf32> to vector<8x8xbf16>
    %c0_13 = arith.constant 0 : index
    %c8 = arith.constant 8 : index
    %45 = vector.load %arg6[%c0_13, %c8] : memref<8x32xbf16, #tpu.memory_space<vmem>>, vector<8x8xbf16>
    tpu.vector_store %arg6[%c0_13, %c8], %44 {strides = array<i32>} : memref<8x32xbf16, #tpu.memory_space<vmem>>, vector<8x8xbf16>,
    %46 = vector.extract_strided_slice %7 {offsets = [0, 16], sizes = [8, 8], strides = [1, 1]} : vector<8x32xbf16> to vector<8x8xbf16>
    %47 = vector.extract_strided_slice %9 {offsets = [0, 16], sizes = [8, 8], strides = [1, 1]} : vector<8x32xbf16> to vector<8x8xbf16>
    %48 = vector.extract_strided_slice %5 {offsets = [0, 16], sizes = [8, 8], strides = [1, 1]} : vector<8x32xbf16> to vector<8x8xbf16>
    %cst_14 = arith.constant dense<0.000000e+00> : vector<8x8xf32>
    %49 = tpu.matmul %48, %46, %cst_14 {dimension_numbers = #tpu.dot_dimension_numbers<[1], [1], [0], [0], [0, 0, 1, 0], [], []>} : vector<8x8xbf16>, vector<8x8xbf16>, vector<8x8xf32> -> vector<8x8xf32>
    %cst_15 = arith.constant dense<0xFF800000> : vector<8xf32>
    %50 = vector.multi_reduction <maximumf>, %49, %cst_15 [1] : vector<8x8xf32> to vector<8xf32>
    %51 = vector.shape_cast %50 : vector<8xf32> to vector<8x1xf32>
    %52 = vector.broadcast %51 : vector<8x1xf32> to vector<8x8xf32>
    %53 = arith.subf %49, %52 : vector<8x8xf32>
    %54 = math.exp %53 : vector<8x8xf32>
    %55 = arith.truncf %54 : vector<8x8xf32> to vector<8x8xbf16>
    %cst_16 = arith.constant dense<0.000000e+00> : vector<8x8xf32>
    %56 = tpu.matmul %55, %47, %cst_16 {dimension_numbers = #tpu.dot_dimension_numbers<[1], [0], [0], [1], [0, 0, 1, 1], [], []>} : vector<8x8xbf16>, vector<8x8xbf16>, vector<8x8xf32> -> vector<8x8xf32>
    %cst_17 = arith.constant dense<0.000000e+00> : vector<8xf32>
    %57 = vector.multi_reduction <add>, %54, %cst_17 [1] : vector<8x8xf32> to vector<8xf32>
    %58 = vector.shape_cast %57 : vector<8xf32> to vector<8x1xf32>
    %59 = tpu.reciprocal %58 {approx = true} : vector<8x1xf32> -> vector<8x1xf32>
    %60 = vector.broadcast %59 : vector<8x1xf32> to vector<8x8xf32>
    %61 = arith.mulf %56, %60 : vector<8x8xf32>
    %62 = arith.truncf %61 : vector<8x8xf32> to vector<8x8xbf16>
    %c0_18 = arith.constant 0 : index
    %c16 = arith.constant 16 : index
    %63 = vector.load %arg6[%c0_18, %c16] : memref<8x32xbf16, #tpu.memory_space<vmem>>, vector<8x8xbf16>
    tpu.vector_store %arg6[%c0_18, %c16], %62 {strides = array<i32>} : memref<8x32xbf16, #tpu.memory_space<vmem>>, vector<8x8xbf16>,
    %64 = vector.extract_strided_slice %7 {offsets = [0, 24], sizes = [8, 8], strides = [1, 1]} : vector<8x32xbf16> to vector<8x8xbf16>
    %65 = vector.extract_strided_slice %9 {offsets = [0, 24], sizes = [8, 8], strides = [1, 1]} : vector<8x32xbf16> to vector<8x8xbf16>
    %66 = vector.extract_strided_slice %5 {offsets = [0, 24], sizes = [8, 8], strides = [1, 1]} : vector<8x32xbf16> to vector<8x8xbf16>
    %cst_19 = arith.constant dense<0.000000e+00> : vector<8x8xf32>
    %67 = tpu.matmul %66, %64, %cst_19 {dimension_numbers = #tpu.dot_dimension_numbers<[1], [1], [0], [0], [0, 0, 1, 0], [], []>} : vector<8x8xbf16>, vector<8x8xbf16>, vector<8x8xf32> -> vector<8x8xf32>
    %cst_20 = arith.constant dense<0xFF800000> : vector<8xf32>
    %68 = vector.multi_reduction <maximumf>, %67, %cst_20 [1] : vector<8x8xf32> to vector<8xf32>
    %69 = vector.shape_cast %68 : vector<8xf32> to vector<8x1xf32>
    %70 = vector.broadcast %69 : vector<8x1xf32> to vector<8x8xf32>
    %71 = arith.subf %67, %70 : vector<8x8xf32>
    %72 = math.exp %71 : vector<8x8xf32>
    %73 = arith.truncf %72 : vector<8x8xf32> to vector<8x8xbf16>
    %cst_21 = arith.constant dense<0.000000e+00> : vector<8x8xf32>
    %74 = tpu.matmul %73, %65, %cst_21 {dimension_numbers = #tpu.dot_dimension_numbers<[1], [0], [0], [1], [0, 0, 1, 1], [], []>} : vector<8x8xbf16>, vector<8x8xbf16>, vector<8x8xf32> -> vector<8x8xf32>
    %cst_22 = arith.constant dense<0.000000e+00> : vector<8xf32>
    %75 = vector.multi_reduction <add>, %72, %cst_22 [1] : vector<8x8xf32> to vector<8xf32>
    %76 = vector.shape_cast %75 : vector<8xf32> to vector<8x1xf32>
    %77 = tpu.reciprocal %76 {approx = true} : vector<8x1xf32> -> vector<8x1xf32>
    %78 = vector.broadcast %77 : vector<8x1xf32> to vector<8x8xf32>
    %79 = arith.mulf %74, %78 : vector<8x8xf32>
    %80 = arith.truncf %79 : vector<8x8xf32> to vector<8x8xbf16>
    %c0_23 = arith.constant 0 : index
    %c24 = arith.constant 24 : index
    %81 = vector.load %arg6[%c0_23, %c24] : memref<8x32xbf16, #tpu.memory_space<vmem>>, vector<8x8xbf16>
    tpu.vector_store %arg6[%c0_23, %c24], %80 {strides = array<i32>} : memref<8x32xbf16, #tpu.memory_space<vmem>>, vector<8x8xbf16>,
    %c0_24 = arith.constant 0 : index
    %c0_25 = arith.constant 0 : index
    %82 = vector.load %arg6[%c0_24, %c0_25] : memref<8x32xbf16, #tpu.memory_space<vmem>>, vector<8x32xbf16>
    %c0_26 = arith.constant 0 : index
    %c0_27 = arith.constant 0 : index
    %83 = vector.load %arg3[%c0_26, %c0_27] : memref<32x32xbf16, #tpu.memory_space<vmem>>, vector<32x32xbf16>
    %cst_28 = arith.constant dense<0.000000e+00> : vector<8x32xf32>
    %84 = tpu.matmul %82, %83, %cst_28 {dimension_numbers = #tpu.dot_dimension_numbers<[1], [0], [0], [1], [0, 0, 1, 1], [], []>} : vector<8x32xbf16>, vector<32x32xbf16>, vector<8x32xf32> -> vector<8x32xf32>
    %c0_29 = arith.constant 0 : index
    %c0_30 = arith.constant 0 : index
    %85 = vector.load %arg4[%c0_29, %c0_30] : memref<1x32xf32, #tpu.memory_space<vmem>>, vector<1x32xf32>
    %86 = vector.broadcast %85 : vector<1x32xf32> to vector<8x32xf32>
    %87 = arith.addf %84, %86 : vector<8x32xf32>
    %c0_31 = arith.constant 0 : index
    %c0_32 = arith.constant 0 : index
    %88 = vector.load %arg5[%c0_31, %c0_32] : memref<8x32xf32, #tpu.memory_space<vmem>>, vector<8x32xf32>
    tpu.vector_store %arg5[%c0_31, %c0_32], %87 {strides = array<i32>} : memref<8x32xf32, #tpu.memory_space<vmem>>, vector<8x32xf32>,
    return
  }
  func.func @transform_0(%arg0: i32) -> (i32, i32) {
    %c0_i32 = arith.constant 0 : i32
    %c0_i32_0 = arith.constant 0 : i32
    return %arg0, %c0_i32 : i32, i32
  }
  func.func @transform_1(%arg0: i32) -> (i32, i32) {
    %c0_i32 = arith.constant 0 : i32
    %c0_i32_0 = arith.constant 0 : i32
    %c0_i32_1 = arith.constant 0 : i32
    return %c0_i32, %c0_i32_0 : i32, i32
  }
  func.func @transform_2(%arg0: i32) -> (i32, i32) {
    %c0_i32 = arith.constant 0 : i32
    %c0_i32_0 = arith.constant 0 : i32
    %c0_i32_1 = arith.constant 0 : i32
    return %c0_i32, %c0_i32_0 : i32, i32
  }
  func.func @transform_3(%arg0: i32) -> (i32, i32) {
    %c0_i32 = arith.constant 0 : i32
    %c0_i32_0 = arith.constant 0 : i32
    %c0_i32_1 = arith.constant 0 : i32
    return %c0_i32, %c0_i32_0 : i32, i32
  }
  func.func @transform_4(%arg0: i32) -> (i32, i32) {
    %c0_i32 = arith.constant 0 : i32
    %c0_i32_0 = arith.constant 0 : i32
    return %arg0, %c0_i32 : i32, i32
  }
}

</mosaic_0001>

<llo_original>
// kernel: tpu_custom_call.1
$region0: #{tpu_custom_call.1}
  #allocation0 [shape = 'u32[]', space=smem, size = 0x4, offset = 0x4, fixed_abs, tag = 'smem constant byte address 0x4 - core index']
  #allocation1 [shape = 'u32[144,128]{1,0:T(1,128)}', space=vmem, size = 0x12000, scoped, tag = 'internal scratch']
  #allocation2 [shape = 'bf16[8,32]{1,0:T(8,128)(2,1)}', space=vmem, size = 0x800, scoped, tag = 'scratch operand']
  %s0 = inlined_call_operand.hbm [shape: f32[16,32], index: 0, kind: input, shape index: {}]
  %s1 = inlined_call_operand.hbm [shape: bf16[32,96], index: 1, kind: input, shape index: {}]
  %s2 = inlined_call_operand.hbm [shape: bf16[32,32], index: 2, kind: input, shape index: {}]
  %s3 = inlined_call_operand.vmem [shape: f32[1,32], index: 3, kind: input, shape index: {}]
  %s4 = inlined_call_operand.hbm [shape: f32[16,32], index: 4, kind: output, shape index: {}]
  %s5 = sld [smem:[#allocation0]]
  $region61: #{tpu_custom_call.1} parent=0
    _
  %s7 = ssub.s32 1, %s5
  %s8 = scalar_select 0, %s7, %s5
  $region1: #{tpu_custom_call.1} parent=0
    #allocation3 [shape = 'u8[8192]{0}', space=vmem, size = 0x2000, scoped, tag = 'input window, operand 0']
    #allocation4 [shape = 's32[2]{0}', space=sflag, size = 0x8, scoped, tag = 'scoped memory for tpu_custom_call.1']
    #allocation5 [shape = 's32[2]{0}', space=sflag, size = 0x8, scoped, tag = 'scoped memory for tpu_custom_call.1']
    #allocation6 [shape = 'u8[8192]{0}', space=vmem, size = 0x2000, scoped, tag = 'input window, operand 1, single buffered']
    #allocation7 [shape = 's32[1]{0}', space=sflag, size = 0x4, scoped, tag = 'scoped memory for tpu_custom_call.1']
    #allocation8 [shape = 'u8[8192]{0}', space=vmem, size = 0x2000, scoped, tag = 'input window, operand 2, single buffered']
    #allocation9 [shape = 'u8[8192]{0}', space=vmem, size = 0x2000, scoped, tag = 'output window, operand 0']
    %9 = vsyncpa [#allocation4], 0
    %s10 = scalar_lea.sflag [#allocation4], 1
    %11 = vsyncpa %s10, 0
    %12 = vsyncpa [#allocation7], 0
    %13 = vsyncpa [#allocation5], 0
    %s14 = scalar_lea.sflag [#allocation5], 1
    %15 = vsyncpa %s14, 0
    loop: start=0, step=1, limit=4
    $region2: #{tpu_custom_call.1} parent=1 // loop_pre_header
      _
    $region3: #{tpu_custom_call.1} parent=1 // loop_header
      %s17 = sphi 0, %s21
      %p18 = scmp.ge.s32.totalorder %s17, 4
      %s27 = sphi 0, %s29
      %s30 = sphi 0, %s27
      %s31 = sphi 0, %s30
      %s47 = sphi 0, %s31
      %s51 = sphi 0, %s51
      %s53 = sphi 0, %s51
      %s54 = sphi 0, %s53
      %s68 = sphi 0, %s54
      %s72 = sphi 0, %s72
      %s74 = sphi 0, %s72
      %s75 = sphi 0, %s74
      %s89 = sphi 0, %s75
      %s93 = sphi 0, %s93
      %s95 = sphi 0, %s93
      %s96 = sphi 0, %s95
      %s110 = sphi 0, %s96
      %s116 = sphi 0, %s118
      %s119 = sphi 0, %s116
      %s120 = sphi 0, %s119
      %s136 = sphi 0, %s120
    $region4: #{tpu_custom_call.1} parent=1 // loop_header_branch
      %20 = sbr.rel (%p18) target = $region8
    $region5: #{tpu_custom_call.1} parent=1 // loop_body
      %s22 = ssub.s32 %s17, 1
      %s23 = ssub.s32 %s17, 2
      %s24 = sadd.s32 %s17, 1
      %s25 = ssub.s32 %s17, %s24
      %p26 = scmp.eq.s32.totalorder %s25, 0
      %s28 = sadd.s32 %s27, 1
      %s29 = scalar_select %p26, %s27, %s28
      %p32 = pneg %p26
      %p33 = scmp.eq.s32.totalorder %s17, 1
      %p34 = por %p32, %p33
      %p35 = scmp.ne.s32.totalorder %s27, %s30
      %p36 = scmp.eq.s32.totalorder %s17, 0
      %p37 = por %p35, %p36
      %p38 = scmp.ne.s32.totalorder %s27, %s30
      %p39 = scmp.eq.s32.totalorder %s22, 1
      %p40 = por %p38, %p39
      %p41 = scmp.ne.s32.totalorder %s30, %s31
      %p42 = scmp.eq.s32.totalorder %s22, 0
      %p43 = por %p41, %p42
      %p44 = scmp.ne.s32.totalorder %s30, %s31
      %p45 = scmp.eq.s32.totalorder %s23, 1
      %p46 = por %p44, %p45
      %p48 = scmp.ne.s32.totalorder %s31, %s47
      %p49 = scmp.eq.s32.totalorder %s23, 0
      %p50 = por %p48, %p49
      %s52 = sadd.s32 %s51, 1
      %p55 = scmp.eq.s32.totalorder %s17, 1
      %p56 = scmp.ne.s32.totalorder %s51, %s53
      %p57 = scmp.eq.s32.totalorder %s17, 0
      %p58 = por %p56, %p57
      %p59 = scmp.ne.s32.totalorder %s51, %s53
      %p60 = scmp.eq.s32.totalorder %s22, 1
      %p61 = por %p59, %p60
      %p62 = scmp.ne.s32.totalorder %s53, %s54
      %p63 = scmp.eq.s32.totalorder %s22, 0
      %p64 = por %p62, %p63
      %p65 = scmp.ne.s32.totalorder %s53, %s54
      %p66 = scmp.eq.s32.totalorder %s23, 1
      %p67 = por %p65, %p66
      %p69 = scmp.ne.s32.totalorder %s54, %s68
      %p70 = scmp.eq.s32.totalorder %s23, 0
      %p71 = por %p69, %p70
      %s73 = sadd.s32 %s72, 1
      %p76 = scmp.eq.s32.totalorder %s17, 1
      %p77 = scmp.ne.s32.totalorder %s72, %s74
      %p78 = scmp.eq.s32.totalorder %s17, 0
      %p79 = por %p77, %p78
      %p80 = scmp.ne.s32.totalorder %s72, %s74
      %p81 = scmp.eq.s32.totalorder %s22, 1
      %p82 = por %p80, %p81
      %p83 = scmp.ne.s32.totalorder %s74, %s75
      %p84 = scmp.eq.s32.totalorder %s22, 0
      %p85 = por %p83, %p84
      %p86 = scmp.ne.s32.totalorder %s74, %s75
      %p87 = scmp.eq.s32.totalorder %s23, 1
      %p88 = por %p86, %p87
      %p90 = scmp.ne.s32.totalorder %s75, %s89
      %p91 = scmp.eq.s32.totalorder %s23, 0
      %p92 = por %p90, %p91
      %s94 = sadd.s32 %s93, 1
      %p97 = scmp.eq.s32.totalorder %s17, 1
      %p98 = scmp.ne.s32.totalorder %s93, %s95
      %p99 = scmp.eq.s32.totalorder %s17, 0
      %p100 = por %p98, %p99
      %p101 = scmp.ne.s32.totalorder %s93, %s95
      %p102 = scmp.eq.s32.totalorder %s22, 1
      %p103 = por %p101, %p102
      %p104 = scmp.ne.s32.totalorder %s95, %s96
      %p105 = scmp.eq.s32.totalorder %s22, 0
      %p106 = por %p104, %p105
      %p107 = scmp.ne.s32.totalorder %s95, %s96
      %p108 = scmp.eq.s32.totalorder %s23, 1
      %p109 = por %p107, %p108
      %p111 = scmp.ne.s32.totalorder %s96, %s110
      %p112 = scmp.eq.s32.totalorder %s23, 0
      %p113 = por %p111, %p112
      %s114 = ssub.s32 %s17, %s24
      %p115 = scmp.eq.s32.totalorder %s114, 0
      %s117 = sadd.s32 %s116, 1
      %s118 = scalar_select %p115, %s116, %s117
      %p121 = pneg %p115
      %p122 = scmp.eq.s32.totalorder %s17, 1
      %p123 = por %p121, %p122
      %p124 = scmp.ne.s32.totalorder %s116, %s119
      %p125 = scmp.eq.s32.totalorder %s17, 0
      %p126 = por %p124, %p125
      %p127 = scmp.ne.s32.totalorder %s116, %s119
      %p128 = scmp.eq.s32.totalorder %s22, 1
      %p129 = por %p127, %p128
      %p130 = scmp.ne.s32.totalorder %s119, %s120
      %p131 = scmp.eq.s32.totalorder %s22, 0
      %p132 = por %p130, %p131
      %p133 = scmp.ne.s32.totalorder %s119, %s120
      %p134 = scmp.eq.s32.totalorder %s23, 1
      %p135 = por %p133, %p134
      %p137 = scmp.ne.s32.totalorder %s120, %s136
      %p138 = scmp.eq.s32.totalorder %s23, 0
      %p139 = por %p137, %p138
      %p140 = scmp.le.s32.totalorder 1, %s17
      %p141 = scmp.lt.s32.totalorder %s17, 3
      %p142 = pnand %p140, %p141
      %p143 = pneg %p142
      // Predicated region
      $region9: #{tpu_custom_call.1} parent=5 // pred_check
        _
      $region10: #{tpu_custom_call.1} parent=5 // pred_check_branch
        %145 = sbr.rel (%p142) target = $region12
      $region11: #{tpu_custom_call.1} parent=5 // pred_region
        %s146 = ssub.s32 %s17, 1
        // Predicated region
        $region13: #{tpu_custom_call.1} parent=11 // pred_check
          %p147 = pneg %p64
        $region14: #{tpu_custom_call.1} parent=11 // pred_check_branch
          %149 = sbr.rel (%p147) target = $region16
        $region15: #{tpu_custom_call.1} parent=11 // pred_region
          %s151 = ssub.s32 256, 256
          %152 = vsyncadd [#allocation7], %s151
          %s153 = sshll.u32 [#allocation6], 4
          %s154 = int_to_ptr.vmem [resolvable:$true] %s153
          %159 = dma.hbm_to_vmem [thread:$0]  %s1, 256, %s154, [#allocation7], 64, 64, 4
        $region16: #{tpu_custom_call.1} parent=11 // pred_fallthru
          _
        // Predicated region
        $region17: #{tpu_custom_call.1} parent=11 // pred_check
          %p160 = pneg %p85
        $region18: #{tpu_custom_call.1} parent=11 // pred_check_branch
          %162 = sbr.rel (%p160) target = $region20
        $region19: #{tpu_custom_call.1} parent=11 // pred_region
          %s164 = ssub.s32 256, 256
          %165 = vsyncadd [#allocation7], %s164
          %s166 = sshll.u32 [#allocation8], 4
          %s167 = int_to_ptr.vmem [resolvable:$true] %s166
          %172 = dma.hbm_to_vmem [thread:$0]  %s2, 256, %s167, [#allocation7], 64, 64, 4
        $region20: #{tpu_custom_call.1} parent=11 // pred_fallthru
          _
        // Predicated region
        $region21: #{tpu_custom_call.1} parent=11 // pred_check
          %p173 = pneg %p106
        $region22: #{tpu_custom_call.1} parent=11 // pred_check_branch
          %175 = sbr.rel (%p173) target = $region24
        $region23: #{tpu_custom_call.1} parent=11 // pred_region
          _
        $region24: #{tpu_custom_call.1} parent=11 // pred_fallthru
          _
      $region12: #{tpu_custom_call.1} parent=5 // pred_fallthru
        _
      %p176 = scmp.lt.s32.totalorder %s17, 2
      // Predicated region
      $region25: #{tpu_custom_call.1} parent=5 // pred_check
        %p177 = pneg %p176
      $region26: #{tpu_custom_call.1} parent=5 // pred_check_branch
        %179 = sbr.rel (%p177) target = $region28
      $region27: #{tpu_custom_call.1} parent=5 // pred_region
        // Predicated region
        $region29: #{tpu_custom_call.1} parent=27 // pred_check
          %p180 = pneg %p37
        $region30: #{tpu_custom_call.1} parent=27 // pred_check_branch
          %182 = sbr.rel (%p180) target = $region32
        $region31: #{tpu_custom_call.1} parent=27 // pred_region
          %s183 = sand.u32 %s27, 1
          %s184 = scalar_lea.sflag [#allocation4], %s183
          %s185 = sand.u32 %s27, 1
          %s186 = smul.addr %s185, 8
          %s187 = scalar_lea.vmem [#allocation3], %s186
          %s189 = ssub.s32 128, 128
          %190 = vsyncadd %s184, %s189
          %s191 = smul.addr %s17, 128
          %s192 = scalar_lea.hbm %s0, %s191
          %s194 = sshll.u32 %s187, 4
          %s195 = int_to_ptr.vmem [resolvable:$true] %s194
          %197 = dma.hbm_to_vmem [thread:$0]  %s192, 128, %s195, %s184
        $region32: #{tpu_custom_call.1} parent=27 // pred_fallthru
          _
      $region28: #{tpu_custom_call.1} parent=5 // pred_fallthru
        _
      %p198 = scmp.le.s32.totalorder 1, %s17
      %p199 = scmp.lt.s32.totalorder %s17, 3
      %p200 = pnand %p198, %p199
      %p201 = pneg %p200
      // Predicated region
      $region33: #{tpu_custom_call.1} parent=5 // pred_check
        _
      $region34: #{tpu_custom_call.1} parent=5 // pred_check_branch
        %203 = sbr.rel (%p200) target = $region36
      $region35: #{tpu_custom_call.1} parent=5 // pred_region
        %s204 = ssub.s32 %s17, 1
        %s205 = sand.u32 %s30, 1
        %s206 = scalar_lea.sflag [#allocation4], %s205
        %s207 = sand.u32 %s30, 1
        %s208 = smul.addr %s207, 8
        %s209 = scalar_lea.vmem [#allocation3], %s208
        // Predicated region
        $region37: #{tpu_custom_call.1} parent=35 // pred_check
          %p210 = pneg %p43
        $region38: #{tpu_custom_call.1} parent=35 // pred_check_branch
          %212 = sbr.rel (%p210) target = $region40
        $region39: #{tpu_custom_call.1} parent=35 // pred_region
          %213 = dma.done %s206, 128
        $region40: #{tpu_custom_call.1} parent=35 // pred_fallthru
          _
        // Predicated region
        $region41: #{tpu_custom_call.1} parent=35 // pred_check
          %p214 = pneg %p64
        $region42: #{tpu_custom_call.1} parent=35 // pred_check_branch
          %216 = sbr.rel (%p214) target = $region44
        $region43: #{tpu_custom_call.1} parent=35 // pred_region
          %217 = dma.done [#allocation7], 256
        $region44: #{tpu_custom_call.1} parent=35 // pred_fallthru
          _
        // Predicated region
        $region45: #{tpu_custom_call.1} parent=35 // pred_check
          %p218 = pneg %p85
        $region46: #{tpu_custom_call.1} parent=35 // pred_check_branch
          %220 = sbr.rel (%p218) target = $region48
        $region47: #{tpu_custom_call.1} parent=35 // pred_region
          %221 = dma.done [#allocation7], 256
        $region48: #{tpu_custom_call.1} parent=35 // pred_fallthru
          _
        %s222 = sand.u32 %s30, 1
        %s223 = scalar_lea.sflag [#allocation4], %s222
        %s224 = sand.u32 %s30, 1
        %s225 = smul.addr %s224, 8
        %s226 = scalar_lea.vmem [#allocation3], %s225
        %p227 = pneg %p43
        %p228 = pneg %p40
        %p229 = pneg %p64
        %p230 = pneg %p61
        %p231 = pneg %p85
        %p232 = pneg %p82
        %p233 = pneg %p106
        %p234 = pneg %p103
        %p235 = pneg %p132
        %p236 = pneg %p129
        %s237 = sand.u32 %s119, 1
        %s238 = scalar_lea.sflag [#allocation5], %s237
        %s239 = sand.u32 %s119, 1
        %s240 = smul.addr %s239, 8
        %s241 = scalar_lea.vmem [#allocation9], %s240
        %v243 = vld [vmem:[%s209] sm:$0xff]
        %v244 = vpack.c.bf16 %v243, %v243
        %v245 = vld [vmem:[#allocation6] sm:$0xf]
        %v246 = vld [vmem:[#allocation6 + $0x4] sm:$0xf]
        %v247 = vld [vmem:[#allocation6 + $0x8] sm:$0xf]
        %v248 = vld [vmem:[#allocation6 + $0xc] sm:$0xf]
        %v253 = vunpack.c.l.b16 %v245
        %v254 = vunpack.c.l.b16 %v246
        %v255 = vunpack.c.l.b16 %v247
        %v256 = vunpack.c.l.b16 %v248
        %v257 = vpack.c.b16 %v254, %v253
        %v258 = vpack.c.b16 %v256, %v255
        %vm261 = vcmask 261120
        %v263 = vsel %vm261, %v244, 0
        %265 = vmatprep.subr.bf16.mxu0 0
        %266 = vmatpush1.bf16.msra.mxu0 0
        %267 = vmatprep.subr.bf16.mxu0 0
        %268 = vmatpush1.bf16.msra.mxu0 0
        %269 = vmatprep.subr.bf16.mxu0 0
        %270 = vmatpush1.bf16.msra.mxu0 0
        %271 = vmatprep.subr.bf16.mxu0 0
        %272 = vmatpush1.bf16.msra.mxu0 0
        %273 = vmatprep.subr.bf16.mxu0 0
        %274 = vmatpush1.bf16.msra.mxu0 0
        %275 = vmatprep.subr.bf16.mxu0 0
        %276 = vmatpush1.bf16.msra.mxu0 0
        %277 = vmatprep.subr.bf16.mxu0 0
        %278 = vmatpush1.bf16.msra.mxu0 %v258
        %279 = vmatprep.subr.bf16.mxu0 0
        %280 = vmatpush1.bf16.msra.mxu0 %v257
        %281 = vmatprep.subr.bf16.mxu0 0
        %282 = vmatpush2.bf16.msra.mxu0 0
        %283 = vmatprep.subr.bf16.mxu0 0
        %284 = vmatpush2.bf16.msra.mxu0 0
        %285 = vmatprep.subr.bf16.mxu0 0
        %286 = vmatpush2.bf16.msra.mxu0 0
        %287 = vmatprep.subr.bf16.mxu0 0
        %288 = vmatpush2.bf16.msra.mxu0 0
        %289 = vmatprep.subr.bf16.mxu0 0
        %290 = vmatpush2.bf16.msra.mxu0 0
        %291 = vmatprep.subr.bf16.mxu0 0
        %292 = vmatpush2.bf16.msra.mxu0 0
        %293 = vmatprep.subr.bf16.mxu0 0
        %294 = vmatpush2.bf16.msra.mxu0 0
        %295 = vmatprep.subr.bf16.mxu0 0
        %296 = vmatpush2.bf16.msra.mxu0 0
        %297 = vmatprep.mubr.bf16.mxu0 0
        %298 = vmatmul.mubr.bf16.gmra.mxu0 %v263
        %v299 = vpop.f32.mrf.mxu0
        %v300 = vadd.f32 0.0, %v299
        %v301 = vpop.f32.mrf.mxu0
        %v302 = vpop.f32.mrf.mxu0
        %v303 = vpop.f32.mrf.mxu0
        %304 = vdwg.mxu0
        %v305 = vpack.c.bf16 %v300, %v300
        %307 = vrot.lane.b32.xlu0 %v305, 96
        %v308 = vpop.permute.xlu0 %307
        %vm309 = vcmask 64512
        %v311 = vsel %vm309, %v305, 0
        %v314 = vsel %vm309, %v308, 0
        %316 = vmatprep.subr.bf16.mxu0 0
        %317 = vmatpush1.bf16.xpose.msra.mxu0 0
        %318 = vmatprep.subr.bf16.mxu0 0
        %319 = vmatpush1.bf16.xpose.msra.mxu0 0
        %320 = vmatprep.subr.bf16.mxu0 0
        %321 = vmatpush1.bf16.xpose.msra.mxu0 0
        %322 = vmatprep.subr.bf16.mxu0 0
        %323 = vmatpush1.bf16.xpose.msra.mxu0 0
        %324 = vmatprep.subr.bf16.mxu0 0
        %325 = vmatpush1.bf16.xpose.msra.mxu0 0
        %326 = vmatprep.subr.bf16.mxu0 0
        %327 = vmatpush1.bf16.xpose.msra.mxu0 0
        %328 = vmatprep.subr.bf16.mxu0 0
        %329 = vmatpush1.bf16.xpose.msra.mxu0 0
        %330 = vmatprep.subr.bf16.mxu0 0
        %331 = vmatpush1.bf16.xpose.msra.mxu0 %v314
        %332 = vmatprep.subr.bf16.mxu0 0
        %333 = vmatpush2.bf16.xpose.msra.mxu0 0
        %334 = vmatprep.subr.bf16.mxu0 0
        %335 = vmatpush2.bf16.xpose.msra.mxu0 0
        %336 = vmatprep.subr.bf16.mxu0 0
        %337 = vmatpush2.bf16.xpose.msra.mxu0 0
        %338 = vmatprep.subr.bf16.mxu0 0
        %339 = vmatpush2.bf16.xpose.msra.mxu0 0
        %340 = vmatprep.subr.bf16.mxu0 0
        %341 = vmatpush2.bf16.xpose.msra.mxu0 0
        %342 = vmatprep.subr.bf16.mxu0 0
        %343 = vmatpush2.bf16.xpose.msra.mxu0 0
        %344 = vmatprep.subr.bf16.mxu0 0
        %345 = vmatpush2.bf16.xpose.msra.mxu0 0
        %346 = vmatprep.subr.bf16.mxu0 0
        %347 = vmatpush2.bf16.xpose.msra.mxu0 0
        %348 = vmatprep.mubr.bf16.mxu0 0
        %349 = vmatmul.mubr.bf16.gmra.mxu0 %v311
        %v350 = vpop.f32.mrf.mxu0
        %v351 = vadd.f32 0.0, %v350
        %v352 = vpop.f32.mrf.mxu0
        %v353 = vpop.f32.mrf.mxu0
        %v354 = vpop.f32.mrf.mxu0
        %355 = vdwg.mxu0
        %v356 = vsel %vm309, %v351, -inf
        %357 = vmax.xlane.f32.xlu0 %v356
        %v358 = vpop.xlane.xlu0 %357
        %v359 = vsub.f32 %v351, %v358
        %v360 = vmul.f32 %v359, 1.442695
        %v361 = vpow.pop %v360
        %v362 = vpack.c.bf16 %v361, %v361
        %363 = vrot.lane.b32.xlu0 %v305, 64
        %v364 = vpop.permute.xlu0 %363
        %v366 = vsel %vm309, %v362, 0
        %vm368 = vcmask 1043456
        %v370 = vsel %vm368, %v364, 0
        %372 = vmatprep.subr.bf16.mxu0 0
        %373 = vmatpush1.bf16.msra.mxu0 0
        %374 = vmatprep.subr.bf16.mxu0 0
        %375 = vmatpush1.bf16.msra.mxu0 0
        %376 = vmatprep.subr.bf16.mxu0 0
        %377 = vmatpush1.bf16.msra.mxu0 0
        %378 = vmatprep.subr.bf16.mxu0 0
        %379 = vmatpush1.bf16.msra.mxu0 0
        %380 = vmatprep.subr.bf16.mxu0 0
        %381 = vmatpush1.bf16.msra.mxu0 0
        %382 = vmatprep.subr.bf16.mxu0 0
        %383 = vmatpush1.bf16.msra.mxu0 0
        %384 = vmatprep.subr.bf16.mxu0 0
        %385 = vmatpush1.bf16.msra.mxu0 0
        %386 = vmatprep.subr.bf16.mxu0 0
        %387 = vmatpush1.bf16.msra.mxu0 %v370
        %388 = vmatprep.subr.bf16.mxu0 0
        %389 = vmatpush2.bf16.msra.mxu0 0
        %390 = vmatprep.subr.bf16.mxu0 0
        %391 = vmatpush2.bf16.msra.mxu0 0
        %392 = vmatprep.subr.bf16.mxu0 0
        %393 = vmatpush2.bf16.msra.mxu0 0
        %394 = vmatprep.subr.bf16.mxu0 0
        %395 = vmatpush2.bf16.msra.mxu0 0
        %396 = vmatprep.subr.bf16.mxu0 0
        %397 = vmatpush2.bf16.msra.mxu0 0
        %398 = vmatprep.subr.bf16.mxu0 0
        %399 = vmatpush2.bf16.msra.mxu0 0
        %400 = vmatprep.subr.bf16.mxu0 0
        %401 = vmatpush2.bf16.msra.mxu0 0
        %402 = vmatprep.subr.bf16.mxu0 0
        %403 = vmatpush2.bf16.msra.mxu0 0
        %404 = vmatprep.mubr.bf16.mxu0 0
        %405 = vmatmul.mubr.bf16.gmra.mxu0 %v366
        %v406 = vpop.f32.mrf.mxu0
        %v407 = vadd.f32 0.0, %v406
        %v408 = vpop.f32.mrf.mxu0
        %v409 = vpop.f32.mrf.mxu0
        %v410 = vpop.f32.mrf.mxu0
        %411 = vdwg.mxu0
        %v412 = vsel %vm309, %v361, 0.0
        %413 = vadd.xlane.f32.xlu0 %v412
        %v414 = vpop.xlane.xlu0 %413
        %v415 = vrcp.pop %v414
        %v416 = vmul.f32 %v407, %v415
        %v417 = vpack.c.bf16 %v416, %v416
        %vm418 = vcmask 60416
        %419 = vst.msk [vmem:[#allocation2] sm:$0xf] %vm418, %v417
        %420 = vrot.lane.b32.xlu0 %v305, 120
        %v421 = vpop.permute.xlu0 %420
        %422 = vrot.lane.b32.xlu0 %v305, 88
        %v423 = vpop.permute.xlu0 %422
        %v425 = vsel %vm309, %v421, 0
        %v428 = vsel %vm309, %v423, 0
        %430 = vmatprep.subr.bf16.mxu0 0
        %431 = vmatpush1.bf16.xpose.msra.mxu0 0
        %432 = vmatprep.subr.bf16.mxu0 0
        %433 = vmatpush1.bf16.xpose.msra.mxu0 0
        %434 = vmatprep.subr.bf16.mxu0 0
        %435 = vmatpush1.bf16.xpose.msra.mxu0 0
        %436 = vmatprep.subr.bf16.mxu0 0
        %437 = vmatpush1.bf16.xpose.msra.mxu0 0
        %438 = vmatprep.subr.bf16.mxu0 0
        %439 = vmatpush1.bf16.xpose.msra.mxu0 0
        %440 = vmatprep.subr.bf16.mxu0 0
        %441 = vmatpush1.bf16.xpose.msra.mxu0 0
        %442 = vmatprep.subr.bf16.mxu0 0
        %443 = vmatpush1.bf16.xpose.msra.mxu0 0
        %444 = vmatprep.subr.bf16.mxu0 0
        %445 = vmatpush1.bf16.xpose.msra.mxu0 %v428
        %446 = vmatprep.subr.bf16.mxu0 0
        %447 = vmatpush2.bf16.xpose.msra.mxu0 0
        %448 = vmatprep.subr.bf16.mxu0 0
        %449 = vmatpush2.bf16.xpose.msra.mxu0 0
        %450 = vmatprep.subr.bf16.mxu0 0
        %451 = vmatpush2.bf16.xpose.msra.mxu0 0
        %452 = vmatprep.subr.bf16.mxu0 0
        %453 = vmatpush2.bf16.xpose.msra.mxu0 0
        %454 = vmatprep.subr.bf16.mxu0 0
        %455 = vmatpush2.bf16.xpose.msra.mxu0 0
        %456 = vmatprep.subr.bf16.mxu0 0
        %457 = vmatpush2.bf16.xpose.msra.mxu0 0
        %458 = vmatprep.subr.bf16.mxu0 0
        %459 = vmatpush2.bf16.xpose.msra.mxu0 0
        %460 = vmatprep.subr.bf16.mxu0 0
        %461 = vmatpush2.bf16.xpose.msra.mxu0 0
        %462 = vmatprep.mubr.bf16.mxu0 0
        %463 = vmatmul.mubr.bf16.gmra.mxu0 %v425
        %v464 = vpop.f32.mrf.mxu0
        %v465 = vadd.f32 0.0, %v464
        %v466 = vpop.f32.mrf.mxu0
        %v467 = vpop.f32.mrf.mxu0
        %v468 = vpop.f32.mrf.mxu0
        %469 = vdwg.mxu0
        %v470 = vsel %vm309, %v465, -inf
        %471 = vmax.xlane.f32.xlu0 %v470
        %v472 = vpop.xlane.xlu0 %471
        %v473 = vsub.f32 %v465, %v472
        %v474 = vmul.f32 %v473, 1.442695
        %v475 = vpow.pop %v474
        %v476 = vpack.c.bf16 %v475, %v475
        %477 = vrot.lane.b32.xlu0 %v305, 56
        %v478 = vpop.permute.xlu0 %477
        %v480 = vsel %vm309, %v476, 0
        %v483 = vsel %vm368, %v478, 0
        %485 = vmatprep.subr.bf16.mxu0 0
        %486 = vmatpush1.bf16.msra.mxu0 0
        %487 = vmatprep.subr.bf16.mxu0 0
        %488 = vmatpush1.bf16.msra.mxu0 0
        %489 = vmatprep.subr.bf16.mxu0 0
        %490 = vmatpush1.bf16.msra.mxu0 0
        %491 = vmatprep.subr.bf16.mxu0 0
        %492 = vmatpush1.bf16.msra.mxu0 0
        %493 = vmatprep.subr.bf16.mxu0 0
        %494 = vmatpush1.bf16.msra.mxu0 0
        %495 = vmatprep.subr.bf16.mxu0 0
        %496 = vmatpush1.bf16.msra.mxu0 0
        %497 = vmatprep.subr.bf16.mxu0 0
        %498 = vmatpush1.bf16.msra.mxu0 0
        %499 = vmatprep.subr.bf16.mxu0 0
        %500 = vmatpush1.bf16.msra.mxu0 %v483
        %501 = vmatprep.subr.bf16.mxu0 0
        %502 = vmatpush2.bf16.msra.mxu0 0
        %503 = vmatprep.subr.bf16.mxu0 0
        %504 = vmatpush2.bf16.msra.mxu0 0
        %505 = vmatprep.subr.bf16.mxu0 0
        %506 = vmatpush2.bf16.msra.mxu0 0
        %507 = vmatprep.subr.bf16.mxu0 0
        %508 = vmatpush2.bf16.msra.mxu0 0
        %509 = vmatprep.subr.bf16.mxu0 0
        %510 = vmatpush2.bf16.msra.mxu0 0
        %511 = vmatprep.subr.bf16.mxu0 0
        %512 = vmatpush2.bf16.msra.mxu0 0
        %513 = vmatprep.subr.bf16.mxu0 0
        %514 = vmatpush2.bf16.msra.mxu0 0
        %515 = vmatprep.subr.bf16.mxu0 0
        %516 = vmatpush2.bf16.msra.mxu0 0
        %517 = vmatprep.mubr.bf16.mxu0 0
        %518 = vmatmul.mubr.bf16.gmra.mxu0 %v480
        %v519 = vpop.f32.mrf.mxu0
        %v520 = vadd.f32 0.0, %v519
        %v521 = vpop.f32.mrf.mxu0
        %v522 = vpop.f32.mrf.mxu0
        %v523 = vpop.f32.mrf.mxu0
        %524 = vdwg.mxu0
        %v525 = vsel %vm309, %v475, 0.0
        %526 = vadd.xlane.f32.xlu0 %v525
        %v527 = vpop.xlane.xlu0 %526
        %v528 = vrcp.pop %v527
        %v529 = vmul.f32 %v520, %v528
        %v530 = vpack.c.bf16 %v529, %v529
        %v532 = vunpack.c.l.b16 %v530
        %v533 = vpack.c.b16 %v532, %v532
        %534 = vrot.lane.b32.xlu0 %v533, 8
        %v535 = vpop.permute.xlu0 %534
        %vm537 = vcmask 126016
        %538 = vst.msk [vmem:[#allocation2] sm:$0xf] %vm537, %v535
        %539 = vrot.lane.b32.xlu0 %v305, 112
        %v540 = vpop.permute.xlu0 %539
        %541 = vrot.lane.b32.xlu0 %v305, 80
        %v542 = vpop.permute.xlu0 %541
        %v544 = vsel %vm309, %v540, 0
        %v547 = vsel %vm309, %v542, 0
        %549 = vmatprep.subr.bf16.mxu0 0
        %550 = vmatpush1.bf16.xpose.msra.mxu0 0
        %551 = vmatprep.subr.bf16.mxu0 0
        %552 = vmatpush1.bf16.xpose.msra.mxu0 0
        %553 = vmatprep.subr.bf16.mxu0 0
        %554 = vmatpush1.bf16.xpose.msra.mxu0 0
        %555 = vmatprep.subr.bf16.mxu0 0
        %556 = vmatpush1.bf16.xpose.msra.mxu0 0
        %557 = vmatprep.subr.bf16.mxu0 0
        %558 = vmatpush1.bf16.xpose.msra.mxu0 0
        %559 = vmatprep.subr.bf16.mxu0 0
        %560 = vmatpush1.bf16.xpose.msra.mxu0 0
        %561 = vmatprep.subr.bf16.mxu0 0
        %562 = vmatpush1.bf16.xpose.msra.mxu0 0
        %563 = vmatprep.subr.bf16.mxu0 0
        %564 = vmatpush1.bf16.xpose.msra.mxu0 %v547
        %565 = vmatprep.subr.bf16.mxu0 0
        %566 = vmatpush2.bf16.xpose.msra.mxu0 0
        %567 = vmatprep.subr.bf16.mxu0 0
        %568 = vmatpush2.bf16.xpose.msra.mxu0 0
        %569 = vmatprep.subr.bf16.mxu0 0
        %570 = vmatpush2.bf16.xpose.msra.mxu0 0
        %571 = vmatprep.subr.bf16.mxu0 0
        %572 = vmatpush2.bf16.xpose.msra.mxu0 0
        %573 = vmatprep.subr.bf16.mxu0 0
        %574 = vmatpush2.bf16.xpose.msra.mxu0 0
        %575 = vmatprep.subr.bf16.mxu0 0
        %576 = vmatpush2.bf16.xpose.msra.mxu0 0
        %577 = vmatprep.subr.bf16.mxu0 0
        %578 = vmatpush2.bf16.xpose.msra.mxu0 0
        %579 = vmatprep.subr.bf16.mxu0 0
        %580 = vmatpush2.bf16.xpose.msra.mxu0 0
        %581 = vmatprep.mubr.bf16.mxu0 0
        %582 = vmatmul.mubr.bf16.gmra.mxu0 %v544
        %v583 = vpop.f32.mrf.mxu0
        %v584 = vadd.f32 0.0, %v583
        %v585 = vpop.f32.mrf.mxu0
        %v586 = vpop.f32.mrf.mxu0
        %v587 = vpop.f32.mrf.mxu0
        %588 = vdwg.mxu0
        %v589 = vsel %vm309, %v584, -inf
        %590 = vmax.xlane.f32.xlu0 %v589
        %v591 = vpop.xlane.xlu0 %590
        %v592 = vsub.f32 %v584, %v591
        %v593 = vmul.f32 %v592, 1.442695
        %v594 = vpow.pop %v593
        %v595 = vpack.c.bf16 %v594, %v594
        %596 = vrot.lane.b32.xlu0 %v305, 48
        %v597 = vpop.permute.xlu0 %596
        %v599 = vsel %vm309, %v595, 0
        %v602 = vsel %vm368, %v597, 0
        %604 = vmatprep.subr.bf16.mxu0 0
        %605 = vmatpush1.bf16.msra.mxu0 0
        %606 = vmatprep.subr.bf16.mxu0 0
        %607 = vmatpush1.bf16.msra.mxu0 0
        %608 = vmatprep.subr.bf16.mxu0 0
        %609 = vmatpush1.bf16.msra.mxu0 0
        %610 = vmatprep.subr.bf16.mxu0 0
        %611 = vmatpush1.bf16.msra.mxu0 0
        %612 = vmatprep.subr.bf16.mxu0 0
        %613 = vmatpush1.bf16.msra.mxu0 0
        %614 = vmatprep.subr.bf16.mxu0 0
        %615 = vmatpush1.bf16.msra.mxu0 0
        %616 = vmatprep.subr.bf16.mxu0 0
        %617 = vmatpush1.bf16.msra.mxu0 0
        %618 = vmatprep.subr.bf16.mxu0 0
        %619 = vmatpush1.bf16.msra.mxu0 %v602
        %620 = vmatprep.subr.bf16.mxu0 0
        %621 = vmatpush2.bf16.msra.mxu0 0
        %622 = vmatprep.subr.bf16.mxu0 0
        %623 = vmatpush2.bf16.msra.mxu0 0
        %624 = vmatprep.subr.bf16.mxu0 0
        %625 = vmatpush2.bf16.msra.mxu0 0
        %626 = vmatprep.subr.bf16.mxu0 0
        %627 = vmatpush2.bf16.msra.mxu0 0
        %628 = vmatprep.subr.bf16.mxu0 0
        %629 = vmatpush2.bf16.msra.mxu0 0
        %630 = vmatprep.subr.bf16.mxu0 0
        %631 = vmatpush2.bf16.msra.mxu0 0
        %632 = vmatprep.subr.bf16.mxu0 0
        %633 = vmatpush2.bf16.msra.mxu0 0
        %634 = vmatprep.subr.bf16.mxu0 0
        %635 = vmatpush2.bf16.msra.mxu0 0
        %636 = vmatprep.mubr.bf16.mxu0 0
        %637 = vmatmul.mubr.bf16.gmra.mxu0 %v599
        %v638 = vpop.f32.mrf.mxu0
        %v639 = vadd.f32 0.0, %v638
        %v640 = vpop.f32.mrf.mxu0
        %v641 = vpop.f32.mrf.mxu0
        %v642 = vpop.f32.mrf.mxu0
        %643 = vdwg.mxu0
        %v644 = vsel %vm309, %v594, 0.0
        %645 = vadd.xlane.f32.xlu0 %v644
        %v646 = vpop.xlane.xlu0 %645
        %v647 = vrcp.pop %v646
        %v648 = vmul.f32 %v639, %v647
        %v649 = vpack.c.bf16 %v648, %v648
        %v651 = vunpack.c.l.b16 %v649
        %v652 = vpack.c.b16 %v651, %v651
        %653 = vrot.lane.b32.xlu0 %v652, 16
        %v654 = vpop.permute.xlu0 %653
        %vm656 = vcmask 191616
        %657 = vst.msk [vmem:[#allocation2] sm:$0xf] %vm656, %v654
        %658 = vrot.lane.b32.xlu0 %v305, 104
        %v659 = vpop.permute.xlu0 %658
        %660 = vrot.lane.b32.xlu0 %v305, 72
        %v661 = vpop.permute.xlu0 %660
        %v663 = vsel %vm309, %v659, 0
        %v666 = vsel %vm309, %v661, 0
        %668 = vmatprep.subr.bf16.mxu0 0
        %669 = vmatpush1.bf16.xpose.msra.mxu0 0
        %670 = vmatprep.subr.bf16.mxu0 0
        %671 = vmatpush1.bf16.xpose.msra.mxu0 0
        %672 = vmatprep.subr.bf16.mxu0 0
        %673 = vmatpush1.bf16.xpose.msra.mxu0 0
        %674 = vmatprep.subr.bf16.mxu0 0
        %675 = vmatpush1.bf16.xpose.msra.mxu0 0
        %676 = vmatprep.subr.bf16.mxu0 0
        %677 = vmatpush1.bf16.xpose.msra.mxu0 0
        %678 = vmatprep.subr.bf16.mxu0 0
        %679 = vmatpush1.bf16.xpose.msra.mxu0 0
        %680 = vmatprep.subr.bf16.mxu0 0
        %681 = vmatpush1.bf16.xpose.msra.mxu0 0
        %682 = vmatprep.subr.bf16.mxu0 0
        %683 = vmatpush1.bf16.xpose.msra.mxu0 %v666
        %684 = vmatprep.subr.bf16.mxu0 0
        %685 = vmatpush2.bf16.xpose.msra.mxu0 0
        %686 = vmatprep.subr.bf16.mxu0 0
        %687 = vmatpush2.bf16.xpose.msra.mxu0 0
        %688 = vmatprep.subr.bf16.mxu0 0
        %689 = vmatpush2.bf16.xpose.msra.mxu0 0
        %690 = vmatprep.subr.bf16.mxu0 0
        %691 = vmatpush2.bf16.xpose.msra.mxu0 0
        %692 = vmatprep.subr.bf16.mxu0 0
        %693 = vmatpush2.bf16.xpose.msra.mxu0 0
        %694 = vmatprep.subr.bf16.mxu0 0
        %695 = vmatpush2.bf16.xpose.msra.mxu0 0
        %696 = vmatprep.subr.bf16.mxu0 0
        %697 = vmatpush2.bf16.xpose.msra.mxu0 0
        %698 = vmatprep.subr.bf16.mxu0 0
        %699 = vmatpush2.bf16.xpose.msra.mxu0 0
        %700 = vmatprep.mubr.bf16.mxu0 0
        %701 = vmatmul.mubr.bf16.gmra.mxu0 %v663
        %v702 = vpop.f32.mrf.mxu0
        %v703 = vadd.f32 0.0, %v702
        %v704 = vpop.f32.mrf.mxu0
        %v705 = vpop.f32.mrf.mxu0
        %v706 = vpop.f32.mrf.mxu0
        %707 = vdwg.mxu0
        %v708 = vsel %vm309, %v703, -inf
        %709 = vmax.xlane.f32.xlu0 %v708
        %v710 = vpop.xlane.xlu0 %709
        %v711 = vsub.f32 %v703, %v710
        %v712 = vmul.f32 %v711, 1.442695
        %v713 = vpow.pop %v712
        %v714 = vpack.c.bf16 %v713, %v713
        %715 = vrot.lane.b32.xlu0 %v305, 40
        %v716 = vpop.permute.xlu0 %715
        %v718 = vsel %vm309, %v714, 0
        %v721 = vsel %vm368, %v716, 0
        %723 = vmatprep.subr.bf16.mxu0 0
        %724 = vmatpush1.bf16.msra.mxu0 0
        %725 = vmatprep.subr.bf16.mxu0 0
        %726 = vmatpush1.bf16.msra.mxu0 0
        %727 = vmatprep.subr.bf16.mxu0 0
        %728 = vmatpush1.bf16.msra.mxu0 0
        %729 = vmatprep.subr.bf16.mxu0 0
        %730 = vmatpush1.bf16.msra.mxu0 0
        %731 = vmatprep.subr.bf16.mxu0 0
        %732 = vmatpush1.bf16.msra.mxu0 0
        %733 = vmatprep.subr.bf16.mxu0 0
        %734 = vmatpush1.bf16.msra.mxu0 0
        %735 = vmatprep.subr.bf16.mxu0 0
        %736 = vmatpush1.bf16.msra.mxu0 0
        %737 = vmatprep.subr.bf16.mxu0 0
        %738 = vmatpush1.bf16.msra.mxu0 %v721
        %739 = vmatprep.subr.bf16.mxu0 0
        %740 = vmatpush2.bf16.msra.mxu0 0
        %741 = vmatprep.subr.bf16.mxu0 0
        %742 = vmatpush2.bf16.msra.mxu0 0
        %743 = vmatprep.subr.bf16.mxu0 0
        %744 = vmatpush2.bf16.msra.mxu0 0
        %745 = vmatprep.subr.bf16.mxu0 0
        %746 = vmatpush2.bf16.msra.mxu0 0
        %747 = vmatprep.subr.bf16.mxu0 0
        %748 = vmatpush2.bf16.msra.mxu0 0
        %749 = vmatprep.subr.bf16.mxu0 0
        %750 = vmatpush2.bf16.msra.mxu0 0
        %751 = vmatprep.subr.bf16.mxu0 0
        %752 = vmatpush2.bf16.msra.mxu0 0
        %753 = vmatprep.subr.bf16.mxu0 0
        %754 = vmatpush2.bf16.msra.mxu0 0
        %755 = vmatprep.mubr.bf16.mxu0 0
        %756 = vmatmul.mubr.bf16.gmra.mxu0 %v718
        %v757 = vpop.f32.mrf.mxu0
        %v758 = vadd.f32 0.0, %v757
        %v759 = vpop.f32.mrf.mxu0
        %v760 = vpop.f32.mrf.mxu0
        %v761 = vpop.f32.mrf.mxu0
        %762 = vdwg.mxu0
        %v763 = vsel %vm309, %v713, 0.0
        %764 = vadd.xlane.f32.xlu0 %v763
        %v765 = vpop.xlane.xlu0 %764
        %v766 = vrcp.pop %v765
        %v767 = vmul.f32 %v758, %v766
        %v768 = vpack.c.bf16 %v767, %v767
        %v770 = vunpack.c.l.b16 %v768
        %v771 = vpack.c.b16 %v770, %v770
        %772 = vrot.lane.b32.xlu0 %v771, 24
        %v773 = vpop.permute.xlu0 %772
        %vm775 = vcmask 257216
        %776 = vst.msk [vmem:[#allocation2] sm:$0xf] %vm775, %v773
        %v777 = vld [vmem:[#allocation2] sm:$0xf]
        %v778 = vld [vmem:[#allocation8] sm:$0xf]
        %v779 = vld [vmem:[#allocation8 + $0x4] sm:$0xf]
        %v780 = vld [vmem:[#allocation8 + $0x8] sm:$0xf]
        %v781 = vld [vmem:[#allocation8 + $0xc] sm:$0xf]
        %v782 = vld [vmem:[%s3] sm:$0x1]
        %v784 = vlaneseq
        %v785 = vshrl.u32 %v784, 7
        %v786 = vsub.s32 0, %v785
        %v787 = vrot.slane %v782, %v786
        %v793 = vunpack.c.l.b16 %v778
        %v794 = vunpack.c.l.b16 %v779
        %v795 = vunpack.c.l.b16 %v780
        %v796 = vunpack.c.l.b16 %v781
        %v797 = vpack.c.b16 %v794, %v793
        %v798 = vpack.c.b16 %v796, %v795
        %v802 = vsel %vm261, %v777, 0
        %804 = vmatprep.subr.bf16.mxu0 0
        %805 = vmatpush1.bf16.msra.mxu0 0
        %806 = vmatprep.subr.bf16.mxu0 0
        %807 = vmatpush1.bf16.msra.mxu0 0
        %808 = vmatprep.subr.bf16.mxu0 0
        %809 = vmatpush1.bf16.msra.mxu0 0
        %810 = vmatprep.subr.bf16.mxu0 0
        %811 = vmatpush1.bf16.msra.mxu0 0
        %812 = vmatprep.subr.bf16.mxu0 0
        %813 = vmatpush1.bf16.msra.mxu0 0
        %814 = vmatprep.subr.bf16.mxu0 0
        %815 = vmatpush1.bf16.msra.mxu0 0
        %816 = vmatprep.subr.bf16.mxu0 0
        %817 = vmatpush1.bf16.msra.mxu0 %v798
        %818 = vmatprep.subr.bf16.mxu0 0
        %819 = vmatpush1.bf16.msra.mxu0 %v797
        %820 = vmatprep.subr.bf16.mxu0 0
        %821 = vmatpush2.bf16.msra.mxu0 0
        %822 = vmatprep.subr.bf16.mxu0 0
        %823 = vmatpush2.bf16.msra.mxu0 0
        %824 = vmatprep.subr.bf16.mxu0 0
        %825 = vmatpush2.bf16.msra.mxu0 0
        %826 = vmatprep.subr.bf16.mxu0 0
        %827 = vmatpush2.bf16.msra.mxu0 0
        %828 = vmatprep.subr.bf16.mxu0 0
        %829 = vmatpush2.bf16.msra.mxu0 0
        %830 = vmatprep.subr.bf16.mxu0 0
        %831 = vmatpush2.bf16.msra.mxu0 0
        %832 = vmatprep.subr.bf16.mxu0 0
        %833 = vmatpush2.bf16.msra.mxu0 0
        %834 = vmatprep.subr.bf16.mxu0 0
        %835 = vmatpush2.bf16.msra.mxu0 0
        %836 = vmatprep.mubr.bf16.mxu0 0
        %837 = vmatmul.mubr.bf16.gmra.mxu0 %v802
        %v838 = vpop.f32.mrf.mxu0
        %v839 = vadd.f32 %v787, %v838
        %v840 = vpop.f32.mrf.mxu0
        %v841 = vpop.f32.mrf.mxu0
        %v842 = vpop.f32.mrf.mxu0
        %843 = vdwg.mxu0
        %844 = vst.msk [vmem:[%s241] sm:$0xff] %vm261, %v839
        %s845 = sand.u32 %s119, 1
        %s846 = scalar_lea.sflag [#allocation5], %s845
        %s847 = sand.u32 %s119, 1
        %s848 = smul.addr %s847, 8
        %s849 = scalar_lea.vmem [#allocation9], %s848
        // Predicated region
        $region49: #{tpu_custom_call.1} parent=35 // pred_check
          %p850 = pneg %p129
        $region50: #{tpu_custom_call.1} parent=35 // pred_check_branch
          %852 = sbr.rel (%p850) target = $region52
        $region51: #{tpu_custom_call.1} parent=35 // pred_region
          %s854 = ssub.s32 128, 128
          %855 = vsyncadd %s846, %s854
          %s856 = smul.addr %s22, 128
          %s857 = scalar_lea.hbm %s4, %s856
          %s859 = sshll.u32 %s849, 4
          %s860 = int_to_ptr.vmem [resolvable:$true] %s859
          %862 = dma.vmem_to_hbm [thread:$0]  %s860, 128, %s857, %s846
        $region52: #{tpu_custom_call.1} parent=35 // pred_fallthru
          _
      $region36: #{tpu_custom_call.1} parent=5 // pred_fallthru
        _
      %p863 = scmp.le.s32.totalorder 2, %s17
      // Predicated region
      $region53: #{tpu_custom_call.1} parent=5 // pred_check
        %p864 = pneg %p863
      $region54: #{tpu_custom_call.1} parent=5 // pred_check_branch
        %866 = sbr.rel (%p864) target = $region56
      $region55: #{tpu_custom_call.1} parent=5 // pred_region
        %s867 = ssub.s32 %s17, 2
        // Predicated region
        $region57: #{tpu_custom_call.1} parent=55 // pred_check
          %p868 = pneg %p135
        $region58: #{tpu_custom_call.1} parent=55 // pred_check_branch
          %870 = sbr.rel (%p868) target = $region60
        $region59: #{tpu_custom_call.1} parent=55 // pred_region
          %s871 = sand.u32 %s120, 1
          %s872 = scalar_lea.sflag [#allocation5], %s871
          %s873 = sand.u32 %s120, 1
          %s874 = smul.addr %s873, 8
          %s875 = scalar_lea.vmem [#allocation9], %s874
          %876 = dma.done %s872, 128
        $region60: #{tpu_custom_call.1} parent=55 // pred_fallthru
          _
      $region56: #{tpu_custom_call.1} parent=5 // pred_fallthru
        _
    $region6: #{tpu_custom_call.1} parent=1 // loop_footer
      %s21 = sadd.s32 1, %s17
    $region7: #{tpu_custom_call.1} parent=1 // loop_footer_branch
      %16 = sbr.rel target = $region3
    $region8: #{tpu_custom_call.1} parent=1 // loop_exit
      _
    %877 = vsyncpa [#allocation4], 1
    %s878 = scalar_lea.sflag [#allocation4], 1
    %879 = vsyncpa %s878, 1
    %880 = vsyncpa [#allocation7], 1
    %881 = vsyncpa [#allocation5], 1
    %s882 = scalar_lea.sflag [#allocation5], 1
    %883 = vsyncpa %s882, 1

</llo_original>
